<compile_context>
chip_gen: v7x
topology: tpu7x:2x2x1
jax: 0.10.0
libtpu: 0.0.40
codegen_flags: <defaults>
</compile_context>

<pallas_src>
import jax
import jax.numpy as jnp
from jax import lax
from jax.experimental import pallas as pl
from jax.experimental.pallas import tpu as pltpu


_CHUNK = 512  # lanes processed per inner-loop step; tile_n is a multiple of this


def _cost_model_kernel(xt_ref, w1t_ref, b1_ref, w2c_ref, b2_ref, o_ref):
    # xt : [5, TILE] bf16   (features on sublanes, batch on lanes)
    # w1t: [32, 5]  bf16    b1: [32, 1] f32
    # w2c: [32, 1]  f32     b2: SMEM (1, 1) scalar
    # o  : [1, TILE] f32    lane-dense output slab
    f_hid = w1t_ref.shape[0]
    tile = o_ref.shape[1]
    n_chunks = tile // _CHUNK

    w1t = w1t_ref[...]                                        # resident bf16
    b2 = b2_ref[0, 0]                                         # SMEM scalar
    # Hoist lane-broadcasts out of the loop (JAX does not CSE broadcast_in_dim).
    b1b = jnp.broadcast_to(b1_ref[...], (f_hid, _CHUNK))      # [32, CHUNK]
    w2b = jnp.broadcast_to(w2c_ref[...], (f_hid, _CHUNK))     # [32, CHUNK]

    def body(c, carry):
        j = pl.multiple_of(c * _CHUNK, _CHUNK)
        xc = xt_ref[:, pl.ds(j, _CHUNK)]                      # [5, CHUNK] bf16
        # Layer 1 on the MXU (bf16 in, f32 accumulate): [32,5]@[5,CHUNK].
        h = jnp.dot(w1t, xc, preferred_element_type=jnp.float32)
        h = jnp.maximum(h + b1b, 0.0)                         # bias + ReLU (VPU)
        # Layer 2 off the MXU: VPU multiply + XLU sublane reduce -> [1, CHUNK].
        y = jnp.sum(h * w2b, axis=0, keepdims=True)
        o_ref[:, pl.ds(j, _CHUNK)] = (y + b2).astype(o_ref.dtype)
        return carry

    lax.fori_loop(0, n_chunks, body, 0, unroll=min(n_chunks, 8))


def cost_model_forward(x, w1, b1, w2, b2, *, tile_n=32768):
    """y = relu(x @ w1 + b1) @ w2 + b2 via a batch-tiled Pallas TPU kernel.

    x: [N, 5], w1: [5, 32], b1: [1, 32] or [32], w2: [32, 1], b2: [1,1]/[1].
    Returns float32 [N, 1]. Layer-1 inputs are rounded to bf16 inside the
    kernel (f32 accumulation), so results match an f32 reference to ~1e-3 rel.
    """
    n, f_in = x.shape
    f_hid = w1.shape[1]
    assert f_in == w1.shape[0] and w2.shape == (f_hid, 1)

    # Round the tile to a multiple of the in-kernel chunk (also satisfies the
    # (8,128) lane rule), and never make it bigger than the padded batch.
    tile_n = max(_CHUNK, ((int(tile_n) + _CHUNK - 1) // _CHUNK) * _CHUNK)
    n_pad_min = ((n + _CHUNK - 1) // _CHUNK) * _CHUNK
    tile_n = min(tile_n, n_pad_min)
    num_tiles = pl.cdiv(n, tile_n)
    n_pad = num_tiles * tile_n

    # Single pad + transpose pass over x, fused with the bf16 cast
    # (batch on lanes, features on sublanes). Padded lanes are zero.
    xt = jnp.pad(x.astype(jnp.bfloat16), ((0, n_pad - n), (0, 0))).T   # [5, N_pad]
    w1t = w1.T.astype(jnp.bfloat16)                                    # [32, 5]
    b1c = jnp.reshape(b1, (f_hid, 1)).astype(jnp.float32)              # [32, 1]
    w2c = jnp.reshape(w2, (f_hid, 1)).astype(jnp.float32)              # [32, 1]
    b2s = jnp.reshape(b2, (1, 1)).astype(jnp.float32)                  # SMEM scalar

    cost = pl.CostEstimate(
        flops=2 * n_pad * f_in * f_hid + 2 * n_pad * f_hid,
        transcendentals=0,
        bytes_accessed=n_pad * f_in * 2 + n_pad * 4
        + f_in * f_hid * 2 + (2 * f_hid + 1) * 4,
    )

    yt = pl.pallas_call(
        _cost_model_kernel,
        out_shape=jax.ShapeDtypeStruct((1, n_pad), jnp.float32),
        grid_spec=pltpu.PrefetchScalarGridSpec(
            num_scalar_prefetch=0,
            grid=(num_tiles,),
            in_specs=[
                pl.BlockSpec((f_in, tile_n), lambda i: (0, i)),     # x^T tile
                pl.BlockSpec(w1t.shape, lambda i: (0, 0)),          # resident
                pl.BlockSpec(b1c.shape, lambda i: (0, 0)),          # resident
                pl.BlockSpec(w2c.shape, lambda i: (0, 0)),          # resident
                pl.BlockSpec(memory_space=pltpu.MemorySpace.SMEM),  # b2 scalar
            ],
            out_specs=pl.BlockSpec((1, tile_n), lambda i: (0, i)),  # lane-dense
        ),
        compiler_params=pltpu.CompilerParams(
            dimension_semantics=("parallel",),
        ),
        cost_estimate=cost,
    )(xt, w1t, b1c, w2c, b2s)

    # Padded lanes hold garbage (w2·relu(b1)+b2); slice them off before use.
    return yt[0, :n].reshape(n, 1)


def init_params(key):
    # Deterministic init mimicking PyTorch Linear defaults:
    # U(-1/sqrt(fan_in), 1/sqrt(fan_in)) for both weight and bias.
    k1, k2, k3, k4 = jax.random.split(key, 4)
    bound1 = 1.0 / jnp.sqrt(5.0)
    bound2 = 1.0 / jnp.sqrt(32.0)
    w1 = jax.random.uniform(k1, (5, 32), jnp.float32, -bound1, bound1)
    b1 = jax.random.uniform(k2, (1, 32), jnp.float32, -bound1, bound1)
    w2 = jax.random.uniform(k3, (32, 1), jnp.float32, -bound2, bound2)
    b2 = jax.random.uniform(k4, (1, 1), jnp.float32, -bound2, bound2)
    return w1, b1, w2, b2


if __name__ == "__main__":
    key = jax.random.PRNGKey(0)
    k_x, k_p = jax.random.split(key)

    # Small-but-real batch: 2000 rows with tile_n=1024 exercises multi-step
    # tiling (2 tiles), the padded tail, the sub-chunk loop (2 chunks/tile) and
    # the lane-dense output path. Production calls use the 32768-lane default.
    n = 2000
    x = jax.random.normal(k_x, (n, 5), jnp.float32)
    w1, b1, w2, b2 = init_params(k_p)

    y = cost_model_forward(x, w1, b1, w2, b2, tile_n=1024)
    y = jax.block_until_ready(y)

    # Reference with the same bf16 rounding of the layer-1 operands as the
    # kernel (layer 2 and accumulation are f32 in both).
    xb = x.astype(jnp.bfloat16).astype(jnp.float32)
    w1b = w1.astype(jnp.bfloat16).astype(jnp.float32)
    ref = jnp.maximum(xb @ w1b + b1, 0.0) @ w2 + b2
    assert y.shape == (n, 1)
    assert jnp.allclose(y, ref, atol=1e-3, rtol=1e-3)

    print("KERNEL_OK")
</pallas_src>

<mosaic_0001>
module attributes {stable_mosaic.version = 11 : i64} {
  func.func @_cost_model_kernel(%arg0: i32, %arg1: memref<5x1024xbf16, #tpu.memory_space<vmem>>, %arg2: memref<32x5xbf16, #tpu.memory_space<vmem>>, %arg3: memref<32x1xf32, #tpu.memory_space<vmem>>, %arg4: memref<32x1xf32, #tpu.memory_space<vmem>>, %arg5: memref<1x1xf32, #tpu.memory_space<smem>>, %arg6: memref<1x1024xf32, #tpu.memory_space<vmem>>) attributes {dimension_semantics = [#tpu.dimension_semantics<parallel>], iteration_bounds = array<i64: 2>, scalar_prefetch = 0 : i64, scratch_operands = 0 : i64, tpu.core_type = #tpu.core_type<tc>, window_params = [{transform_indices = @transform_0, window_bounds = array<i64: 5, 1024>}, {pipeline_mode = #tpu.pipeline_mode<synchronous>, transform_indices = @transform_1, window_bounds = array<i64: 32, 5>}, {pipeline_mode = #tpu.pipeline_mode<synchronous>, transform_indices = @transform_2, window_bounds = array<i64: 32, 1>}, {pipeline_mode = #tpu.pipeline_mode<synchronous>, transform_indices = @transform_3, window_bounds = array<i64: 32, 1>}, {transform_indices = @transform_4, window_bounds = array<i64: 1, 1>}, {transform_indices = @transform_5, window_bounds = array<i64: 1, 1024>}]} {
    %c0 = arith.constant 0 : index
    %c0_0 = arith.constant 0 : index
    %0 = vector.load %arg2[%c0, %c0_0] : memref<32x5xbf16, #tpu.memory_space<vmem>>, vector<32x5xbf16>
    %c0_1 = arith.constant 0 : index
    %c0_2 = arith.constant 0 : index
    %1 = memref.load %arg5[%c0_1, %c0_2] : memref<1x1xf32, #tpu.memory_space<smem>>
    %c0_3 = arith.constant 0 : index
    %c0_4 = arith.constant 0 : index
    %2 = vector.load %arg3[%c0_3, %c0_4] : memref<32x1xf32, #tpu.memory_space<vmem>>, vector<32x1xf32>
    %3 = vector.shape_cast %2 : vector<32x1xf32> to vector<32x1xf32>
    %4 = vector.broadcast %3 : vector<32x1xf32> to vector<32x512xf32>
    %c0_5 = arith.constant 0 : index
    %c0_6 = arith.constant 0 : index
    %5 = vector.load %arg4[%c0_5, %c0_6] : memref<32x1xf32, #tpu.memory_space<vmem>>, vector<32x1xf32>
    %6 = vector.shape_cast %5 : vector<32x1xf32> to vector<32x1xf32>
    %7 = vector.broadcast %6 : vector<32x1xf32> to vector<32x512xf32>
    %c0_i32 = arith.constant 0 : i32
    %c512_i32 = arith.constant 512 : i32
    %8 = arith.muli %c0_i32, %c512_i32 : i32
    %9 = tpu.assume_multiple %8, 512 : i32
    %c0_7 = arith.constant 0 : index
    %10 = arith.index_cast %9 : i32 to index
    %11 = vector.load %arg1[%c0_7, %10] : memref<5x1024xbf16, #tpu.memory_space<vmem>>, vector<5x512xbf16>
    %cst = arith.constant dense<0.000000e+00> : vector<32x512xf32>
    %12 = tpu.matmul %0, %11, %cst {dimension_numbers = #tpu.dot_dimension_numbers<[1], [0], [0], [1], [0, 0, 1, 1], [], []>} : vector<32x5xbf16>, vector<5x512xbf16>, vector<32x512xf32> -> vector<32x512xf32>
    %13 = arith.addf %12, %4 : vector<32x512xf32>
    %cst_8 = arith.constant 0.000000e+00 : f32
    %14 = vector.broadcast %cst_8 : f32 to vector<32x512xf32>
    %15 = arith.maximumf %13, %14 : vector<32x512xf32>
    %16 = arith.mulf %15, %7 : vector<32x512xf32>
    %cst_9 = arith.constant dense<0.000000e+00> : vector<512xf32>
    %17 = vector.multi_reduction <add>, %16, %cst_9 [0] : vector<32x512xf32> to vector<512xf32>
    %18 = vector.shape_cast %17 : vector<512xf32> to vector<1x512xf32>
    %19 = vector.broadcast %1 : f32 to vector<1x512xf32>
    %20 = arith.addf %18, %19 : vector<1x512xf32>
    %c0_10 = arith.constant 0 : index
    %21 = arith.index_cast %9 : i32 to index
    %22 = vector.load %arg6[%c0_10, %21] : memref<1x1024xf32, #tpu.memory_space<vmem>>, vector<1x512xf32>
    tpu.vector_store %arg6[%c0_10, %21], %20 {strides = array<i32>} : memref<1x1024xf32, #tpu.memory_space<vmem>>, vector<1x512xf32>,
    %c1_i32 = arith.constant 1 : i32
    %c512_i32_11 = arith.constant 512 : i32
    %23 = arith.muli %c1_i32, %c512_i32_11 : i32
    %24 = tpu.assume_multiple %23, 512 : i32
    %c0_12 = arith.constant 0 : index
    %25 = arith.index_cast %24 : i32 to index
    %26 = vector.load %arg1[%c0_12, %25] : memref<5x1024xbf16, #tpu.memory_space<vmem>>, vector<5x512xbf16>
    %cst_13 = arith.constant dense<0.000000e+00> : vector<32x512xf32>
    %27 = tpu.matmul %0, %26, %cst_13 {dimension_numbers = #tpu.dot_dimension_numbers<[1], [0], [0], [1], [0, 0, 1, 1], [], []>} : vector<32x5xbf16>, vector<5x512xbf16>, vector<32x512xf32> -> vector<32x512xf32>
    %28 = arith.addf %27, %4 : vector<32x512xf32>
    %cst_14 = arith.constant 0.000000e+00 : f32
    %29 = vector.broadcast %cst_14 : f32 to vector<32x512xf32>
    %30 = arith.maximumf %28, %29 : vector<32x512xf32>
    %31 = arith.mulf %30, %7 : vector<32x512xf32>
    %cst_15 = arith.constant dense<0.000000e+00> : vector<512xf32>
    %32 = vector.multi_reduction <add>, %31, %cst_15 [0] : vector<32x512xf32> to vector<512xf32>
    %33 = vector.shape_cast %32 : vector<512xf32> to vector<1x512xf32>
    %34 = vector.broadcast %1 : f32 to vector<1x512xf32>
    %35 = arith.addf %33, %34 : vector<1x512xf32>
    %c0_16 = arith.constant 0 : index
    %36 = arith.index_cast %24 : i32 to index
    %37 = vector.load %arg6[%c0_16, %36] : memref<1x1024xf32, #tpu.memory_space<vmem>>, vector<1x512xf32>
    tpu.vector_store %arg6[%c0_16, %36], %35 {strides = array<i32>} : memref<1x1024xf32, #tpu.memory_space<vmem>>, vector<1x512xf32>,
    %c2_i32 = arith.constant 2 : i32
    return
  }
  func.func @transform_0(%arg0: i32) -> (i32, i32) {
    %c0_i32 = arith.constant 0 : i32
    %c0_i32_0 = arith.constant 0 : i32
    return %c0_i32, %arg0 : i32, i32
  }
  func.func @transform_1(%arg0: i32) -> (i32, i32) {
    %c0_i32 = arith.constant 0 : i32
    %c0_i32_0 = arith.constant 0 : i32
    %c0_i32_1 = arith.constant 0 : i32
    return %c0_i32, %c0_i32_0 : i32, i32
  }
  func.func @transform_2(%arg0: i32) -> (i32, i32) {
    %c0_i32 = arith.constant 0 : i32
    %c0_i32_0 = arith.constant 0 : i32
    %c0_i32_1 = arith.constant 0 : i32
    return %c0_i32, %c0_i32_0 : i32, i32
  }
  func.func @transform_3(%arg0: i32) -> (i32, i32) {
    %c0_i32 = arith.constant 0 : i32
    %c0_i32_0 = arith.constant 0 : i32
    %c0_i32_1 = arith.constant 0 : i32
    return %c0_i32, %c0_i32_0 : i32, i32
  }
  func.func @transform_4(%arg0: i32) -> (i32, i32) {
    %c0_i32 = arith.constant 0 : i32
    %c0_i32_0 = arith.constant 0 : i32
    %c0_i32_1 = arith.constant 0 : i32
    return %c0_i32, %c0_i32_0 : i32, i32
  }
  func.func @transform_5(%arg0: i32) -> (i32, i32) {
    %c0_i32 = arith.constant 0 : i32
    %c0_i32_0 = arith.constant 0 : i32
    return %c0_i32, %arg0 : i32, i32
  }
}

</mosaic_0001>

<llo_original>
// kernel: tpu_custom_call.1
$region0: #{tpu_custom_call.1}
  #allocation0 [shape = 'u32[]', space=smem, size = 0x4, offset = 0x4, fixed_abs, tag = 'smem constant byte address 0x4 - core index']
  #allocation1 [shape = 'u32[144,128]{1,0:T(1,128)}', space=vmem, size = 0x12000, scoped, tag = 'internal scratch']
  #allocation2 [shape = 'f32[1,1]{1,0:T(1,128)S(6)}', space=smem, size = 0x200, scoped, tag = 'scoped memory for tpu_custom_call.1']
  %s0 = inlined_call_operand.vmem [shape: bf16[5,2048], index: 0, kind: input, shape index: {}]
  %s1 = inlined_call_operand.vmem [shape: bf16[32,5], index: 1, kind: input, shape index: {}]
  %s2 = inlined_call_operand.vmem [shape: f32[32,1], index: 2, kind: input, shape index: {}]
  %s3 = inlined_call_operand.vmem [shape: f32[32,1], index: 3, kind: input, shape index: {}]
  %s4 = inlined_call_operand.<no memory space> [shape: f32[1,1], index: 4, kind: input, shape index: {}]
  %s5 = inlined_call_operand.hbm [shape: f32[1,2048], index: 5, kind: output, shape index: {}]
  %s6 = sld [smem:[#allocation0]]
  $region53: #{tpu_custom_call.1} parent=0
    _
  %s8 = ssub.s32 1, %s6
  %s9 = scalar_select 0, %s8, %s6
  %10 = sst [smem:[#allocation2]] %s4
  $region1: #{tpu_custom_call.1} parent=0
    #allocation3 [shape = 'u8[8192]{0}', space=vmem, size = 0x2000, scoped, tag = 'output window, operand 0']
    #allocation4 [shape = 's32[2]{0}', space=sflag, size = 0x8, scoped, tag = 'scoped memory for tpu_custom_call.1']
    %11 = vsyncpa [#allocation4], 0
    %s12 = scalar_lea.sflag [#allocation4], 1
    %13 = vsyncpa %s12, 0
    loop: start=0, step=1, limit=4
    $region2: #{tpu_custom_call.1} parent=1 // loop_pre_header
      _
    $region3: #{tpu_custom_call.1} parent=1 // loop_header
      %s15 = sphi 0, %s19
      %p16 = scmp.ge.s32.totalorder %s15, 4
      %s25 = sphi 0, %s27
      %s28 = sphi 0, %s25
      %s29 = sphi 0, %s28
      %s45 = sphi 0, %s29
      %s49 = sphi 0, %s49
      %s51 = sphi 0, %s49
      %s52 = sphi 0, %s51
      %s66 = sphi 0, %s52
      %s70 = sphi 0, %s70
      %s72 = sphi 0, %s70
      %s73 = sphi 0, %s72
      %s87 = sphi 0, %s73
      %s91 = sphi 0, %s91
      %s93 = sphi 0, %s91
      %s94 = sphi 0, %s93
      %s108 = sphi 0, %s94
      %s112 = sphi 0, %s112
      %s114 = sphi 0, %s112
      %s115 = sphi 0, %s114
      %s129 = sphi 0, %s115
      %s135 = sphi 0, %s137
      %s138 = sphi 0, %s135
      %s139 = sphi 0, %s138
      %s155 = sphi 0, %s139
    $region4: #{tpu_custom_call.1} parent=1 // loop_header_branch
      %18 = sbr.rel (%p16) target = $region8
    $region5: #{tpu_custom_call.1} parent=1 // loop_body
      %s20 = ssub.s32 %s15, 1
      %s21 = ssub.s32 %s15, 2
      %s22 = sadd.s32 %s15, 1
      %s23 = ssub.s32 %s15, %s22
      %p24 = scmp.eq.s32.totalorder %s23, 0
      %s26 = sadd.s32 %s25, 1
      %s27 = scalar_select %p24, %s25, %s26
      %p30 = pneg %p24
      %p31 = scmp.eq.s32.totalorder %s15, 1
      %p32 = por %p30, %p31
      %p33 = scmp.ne.s32.totalorder %s25, %s28
      %p34 = scmp.eq.s32.totalorder %s15, 0
      %p35 = por %p33, %p34
      %p36 = scmp.ne.s32.totalorder %s25, %s28
      %p37 = scmp.eq.s32.totalorder %s20, 1
      %p38 = por %p36, %p37
      %p39 = scmp.ne.s32.totalorder %s28, %s29
      %p40 = scmp.eq.s32.totalorder %s20, 0
      %p41 = por %p39, %p40
      %p42 = scmp.ne.s32.totalorder %s28, %s29
      %p43 = scmp.eq.s32.totalorder %s21, 1
      %p44 = por %p42, %p43
      %p46 = scmp.ne.s32.totalorder %s29, %s45
      %p47 = scmp.eq.s32.totalorder %s21, 0
      %p48 = por %p46, %p47
      %s50 = sadd.s32 %s49, 1
      %p53 = scmp.eq.s32.totalorder %s15, 1
      %p54 = scmp.ne.s32.totalorder %s49, %s51
      %p55 = scmp.eq.s32.totalorder %s15, 0
      %p56 = por %p54, %p55
      %p57 = scmp.ne.s32.totalorder %s49, %s51
      %p58 = scmp.eq.s32.totalorder %s20, 1
      %p59 = por %p57, %p58
      %p60 = scmp.ne.s32.totalorder %s51, %s52
      %p61 = scmp.eq.s32.totalorder %s20, 0
      %p62 = por %p60, %p61
      %p63 = scmp.ne.s32.totalorder %s51, %s52
      %p64 = scmp.eq.s32.totalorder %s21, 1
      %p65 = por %p63, %p64
      %p67 = scmp.ne.s32.totalorder %s52, %s66
      %p68 = scmp.eq.s32.totalorder %s21, 0
      %p69 = por %p67, %p68
      %s71 = sadd.s32 %s70, 1
      %p74 = scmp.eq.s32.totalorder %s15, 1
      %p75 = scmp.ne.s32.totalorder %s70, %s72
      %p76 = scmp.eq.s32.totalorder %s15, 0
      %p77 = por %p75, %p76
      %p78 = scmp.ne.s32.totalorder %s70, %s72
      %p79 = scmp.eq.s32.totalorder %s20, 1
      %p80 = por %p78, %p79
      %p81 = scmp.ne.s32.totalorder %s72, %s73
      %p82 = scmp.eq.s32.totalorder %s20, 0
      %p83 = por %p81, %p82
      %p84 = scmp.ne.s32.totalorder %s72, %s73
      %p85 = scmp.eq.s32.totalorder %s21, 1
      %p86 = por %p84, %p85
      %p88 = scmp.ne.s32.totalorder %s73, %s87
      %p89 = scmp.eq.s32.totalorder %s21, 0
      %p90 = por %p88, %p89
      %s92 = sadd.s32 %s91, 1
      %p95 = scmp.eq.s32.totalorder %s15, 1
      %p96 = scmp.ne.s32.totalorder %s91, %s93
      %p97 = scmp.eq.s32.totalorder %s15, 0
      %p98 = por %p96, %p97
      %p99 = scmp.ne.s32.totalorder %s91, %s93
      %p100 = scmp.eq.s32.totalorder %s20, 1
      %p101 = por %p99, %p100
      %p102 = scmp.ne.s32.totalorder %s93, %s94
      %p103 = scmp.eq.s32.totalorder %s20, 0
      %p104 = por %p102, %p103
      %p105 = scmp.ne.s32.totalorder %s93, %s94
      %p106 = scmp.eq.s32.totalorder %s21, 1
      %p107 = por %p105, %p106
      %p109 = scmp.ne.s32.totalorder %s94, %s108
      %p110 = scmp.eq.s32.totalorder %s21, 0
      %p111 = por %p109, %p110
      %s113 = sadd.s32 %s112, 1
      %p116 = scmp.eq.s32.totalorder %s15, 1
      %p117 = scmp.ne.s32.totalorder %s112, %s114
      %p118 = scmp.eq.s32.totalorder %s15, 0
      %p119 = por %p117, %p118
      %p120 = scmp.ne.s32.totalorder %s112, %s114
      %p121 = scmp.eq.s32.totalorder %s20, 1
      %p122 = por %p120, %p121
      %p123 = scmp.ne.s32.totalorder %s114, %s115
      %p124 = scmp.eq.s32.totalorder %s20, 0
      %p125 = por %p123, %p124
      %p126 = scmp.ne.s32.totalorder %s114, %s115
      %p127 = scmp.eq.s32.totalorder %s21, 1
      %p128 = por %p126, %p127
      %p130 = scmp.ne.s32.totalorder %s115, %s129
      %p131 = scmp.eq.s32.totalorder %s21, 0
      %p132 = por %p130, %p131
      %s133 = ssub.s32 %s15, %s22
      %p134 = scmp.eq.s32.totalorder %s133, 0
      %s136 = sadd.s32 %s135, 1
      %s137 = scalar_select %p134, %s135, %s136
      %p140 = pneg %p134
      %p141 = scmp.eq.s32.totalorder %s15, 1
      %p142 = por %p140, %p141
      %p143 = scmp.ne.s32.totalorder %s135, %s138
      %p144 = scmp.eq.s32.totalorder %s15, 0
      %p145 = por %p143, %p144
      %p146 = scmp.ne.s32.totalorder %s135, %s138
      %p147 = scmp.eq.s32.totalorder %s20, 1
      %p148 = por %p146, %p147
      %p149 = scmp.ne.s32.totalorder %s138, %s139
      %p150 = scmp.eq.s32.totalorder %s20, 0
      %p151 = por %p149, %p150
      %p152 = scmp.ne.s32.totalorder %s138, %s139
      %p153 = scmp.eq.s32.totalorder %s21, 1
      %p154 = por %p152, %p153
      %p156 = scmp.ne.s32.totalorder %s139, %s155
      %p157 = scmp.eq.s32.totalorder %s21, 0
      %p158 = por %p156, %p157
      %p159 = scmp.le.s32.totalorder 1, %s15
      %p160 = scmp.lt.s32.totalorder %s15, 3
      %p161 = pnand %p159, %p160
      %p162 = pneg %p161
      // Predicated region
      $region9: #{tpu_custom_call.1} parent=5 // pred_check
        _
      $region10: #{tpu_custom_call.1} parent=5 // pred_check_branch
        %164 = sbr.rel (%p161) target = $region12
      $region11: #{tpu_custom_call.1} parent=5 // pred_region
        %s165 = ssub.s32 %s15, 1
        // Predicated region
        $region13: #{tpu_custom_call.1} parent=11 // pred_check
          %p166 = pneg %p62
        $region14: #{tpu_custom_call.1} parent=11 // pred_check_branch
          %168 = sbr.rel (%p166) target = $region16
        $region15: #{tpu_custom_call.1} parent=11 // pred_region
          _
        $region16: #{tpu_custom_call.1} parent=11 // pred_fallthru
          _
        // Predicated region
        $region17: #{tpu_custom_call.1} parent=11 // pred_check
          %p169 = pneg %p83
        $region18: #{tpu_custom_call.1} parent=11 // pred_check_branch
          %171 = sbr.rel (%p169) target = $region20
        $region19: #{tpu_custom_call.1} parent=11 // pred_region
          _
        $region20: #{tpu_custom_call.1} parent=11 // pred_fallthru
          _
        // Predicated region
        $region21: #{tpu_custom_call.1} parent=11 // pred_check
          %p172 = pneg %p104
        $region22: #{tpu_custom_call.1} parent=11 // pred_check_branch
          %174 = sbr.rel (%p172) target = $region24
        $region23: #{tpu_custom_call.1} parent=11 // pred_region
          _
        $region24: #{tpu_custom_call.1} parent=11 // pred_fallthru
          _
        // Predicated region
        $region25: #{tpu_custom_call.1} parent=11 // pred_check
          %p175 = pneg %p125
        $region26: #{tpu_custom_call.1} parent=11 // pred_check_branch
          %177 = sbr.rel (%p175) target = $region28
        $region27: #{tpu_custom_call.1} parent=11 // pred_region
          _
        $region28: #{tpu_custom_call.1} parent=11 // pred_fallthru
          _
      $region12: #{tpu_custom_call.1} parent=5 // pred_fallthru
        _
      %p178 = scmp.lt.s32.totalorder %s15, 2
      // Predicated region
      $region29: #{tpu_custom_call.1} parent=5 // pred_check
        %p179 = pneg %p178
      $region30: #{tpu_custom_call.1} parent=5 // pred_check_branch
        %181 = sbr.rel (%p179) target = $region32
      $region31: #{tpu_custom_call.1} parent=5 // pred_region
        // Predicated region
        $region33: #{tpu_custom_call.1} parent=31 // pred_check
          %p182 = pneg %p35
        $region34: #{tpu_custom_call.1} parent=31 // pred_check_branch
          %184 = sbr.rel (%p182) target = $region36
        $region35: #{tpu_custom_call.1} parent=31 // pred_region
          %s185 = smul.u32 8, %s15
          %p186 = scmp.lt.s32.totalorder %s185, 15
          %s187 = scalar_select %p186, %s185, 15
          %s188 = smul.addr %s187, 4
          %s189 = scalar_lea.vmem %s0, %s188
          %s190 = smul.u32 8, %s15
        $region36: #{tpu_custom_call.1} parent=31 // pred_fallthru
          _
      $region32: #{tpu_custom_call.1} parent=5 // pred_fallthru
        _
      %p191 = scmp.le.s32.totalorder 1, %s15
      %p192 = scmp.lt.s32.totalorder %s15, 3
      %p193 = pnand %p191, %p192
      %p194 = pneg %p193
      // Predicated region
      $region37: #{tpu_custom_call.1} parent=5 // pred_check
        _
      $region38: #{tpu_custom_call.1} parent=5 // pred_check_branch
        %196 = sbr.rel (%p193) target = $region40
      $region39: #{tpu_custom_call.1} parent=5 // pred_region
        %s197 = ssub.s32 %s15, 1
        %s198 = smul.u32 8, %s20
        %p199 = scmp.lt.s32.totalorder %s198, 15
        %s200 = scalar_select %p199, %s198, 15
        %s201 = smul.addr %s200, 4
        %s202 = scalar_lea.vmem %s0, %s201
        %p203 = pneg %p41
        %p204 = pneg %p38
        %p205 = pneg %p62
        %p206 = pneg %p59
        %p207 = pneg %p83
        %p208 = pneg %p80
        %p209 = pneg %p104
        %p210 = pneg %p101
        %p211 = pneg %p125
        %p212 = pneg %p122
        %p213 = pneg %p151
        %p214 = pneg %p148
        %s215 = sand.u32 %s138, 1
        %s216 = scalar_lea.sflag [#allocation4], %s215
        %s217 = sand.u32 %s138, 1
        %s218 = smul.addr %s217, 8
        %s219 = scalar_lea.vmem [#allocation3], %s218
        %s220 = smul.u32 8, %s20
        %p221 = scmp.lt.s32.totalorder %s220, 15
        %s222 = scalar_select %p221, %s220, 15
        %s223 = smul.addr %s222, 4
        %s224 = scalar_lea.vmem %s0, %s223
        %s225 = smul.u32 8, %s20
        %s226 = smul.u32 8, %s20
        %v228 = vld [vmem:[%s1] sm:$0xf]
        %v229 = vld [vmem:[%s1 + $0x4] sm:$0xf]
        %v230 = vld [vmem:[%s1 + $0x8] sm:$0xf]
        %v231 = vld [vmem:[%s1 + $0xc] sm:$0xf]
        %s232 = sld [smem:[#allocation2]]
        %v233 = vld [vmem:[%s2] sm:$0xff]
        %v234 = vld [vmem:[%s2 + $0x8] sm:$0xff]
        %v235 = vld [vmem:[%s2 + $0x10] sm:$0xff]
        %v236 = vld [vmem:[%s2 + $0x18] sm:$0xff]
        %238 = vset.pattern.permute.xlu0 0
        %239 = vperm.xlu0 %238, %v233
        %v240 = vpop.permute.xlu0 %239
        %243 = vset.pattern.permute.xlu0 0
        %244 = vperm.xlu0 %243, %v234
        %v245 = vpop.permute.xlu0 %244
        %248 = vset.pattern.permute.xlu0 0
        %249 = vperm.xlu0 %248, %v235
        %v250 = vpop.permute.xlu0 %249
        %253 = vset.pattern.permute.xlu0 0
        %254 = vperm.xlu0 %253, %v236
        %v255 = vpop.permute.xlu0 %254
        %v257 = vld [vmem:[%s3] sm:$0xff]
        %v258 = vld [vmem:[%s3 + $0x8] sm:$0xff]
        %v259 = vld [vmem:[%s3 + $0x10] sm:$0xff]
        %v260 = vld [vmem:[%s3 + $0x18] sm:$0xff]
        %262 = vset.pattern.permute.xlu0 0
        %263 = vperm.xlu0 %262, %v257
        %v264 = vpop.permute.xlu0 %263
        %267 = vset.pattern.permute.xlu0 0
        %268 = vperm.xlu0 %267, %v258
        %v269 = vpop.permute.xlu0 %268
        %272 = vset.pattern.permute.xlu0 0
        %273 = vperm.xlu0 %272, %v259
        %v274 = vpop.permute.xlu0 %273
        %277 = vset.pattern.permute.xlu0 0
        %278 = vperm.xlu0 %277, %v260
        %v279 = vpop.permute.xlu0 %278
        %v281 = vld [vmem:[%s224] sm:$0x77]
        %v282 = vld [vmem:[%s224 + $0x8] sm:$0x77]
        %v287 = vunpack.c.l.b16 %v228
        %v288 = vunpack.c.l.b16 %v229
        %v289 = vunpack.c.l.b16 %v230
        %v290 = vunpack.c.l.b16 %v231
        %v291 = vpack.c.b16 %v288, %v287
        %v292 = vpack.c.b16 %v290, %v289
        %v295 = vunpack.c.l.b16 %v281
        %v296 = vunpack.c.h.b16 %v281
        %v297 = vunpack.c.l.b16 %v282
        %v298 = vunpack.c.h.b16 %v282
        %v299 = vpack.c.b16 %v295, %v295
        %v300 = vpack.c.b16 %v296, %v296
        %v301 = vpack.c.b16 %v297, %v297
        %v302 = vpack.c.b16 %v298, %v298
        %vm303 = vcmask 39936
        %v305 = vsel %vm303, %v291, 0
        %v308 = vsel %vm303, %v292, 0
        %vm310 = vcmask 1041408
        %vm311 = vcmask 1042432
        %v312 = vsel %vm310, 4294967295, 65535
        %v313 = vsel %vm311, %v312, 0
        %v315 = vand.u32 %v299, %v313
        %v318 = vand.u32 %v300, %v313
        %v321 = vand.u32 %v301, %v313
        %v324 = vand.u32 %v302, %v313
        %326 = vmatprep.subr.bf16.mxu0 %v318
        %327 = vmatpush1.bf16.msra.mxu0 %v315
        %328 = vmatprep.subr.bf16.mxu0 0
        %329 = vmatpush1.bf16.msra.mxu0 0
        %330 = vmatprep.subr.bf16.mxu0 0
        %331 = vmatpush1.bf16.msra.mxu0 0
        %332 = vmatprep.subr.bf16.mxu0 0
        %333 = vmatpush1.bf16.msra.mxu0 0
        %334 = vmatprep.subr.bf16.mxu0 0
        %335 = vmatpush1.bf16.msra.mxu0 0
        %336 = vmatprep.subr.bf16.mxu0 0
        %337 = vmatpush1.bf16.msra.mxu0 0
        %338 = vmatprep.subr.bf16.mxu0 0
        %339 = vmatpush1.bf16.msra.mxu0 0
        %340 = vmatprep.subr.bf16.mxu0 0
        %341 = vmatpush1.bf16.msra.mxu0 0
        %342 = vmatprep.subr.bf16.mxu0 0
        %343 = vmatpush1.bf16.msra.mxu0 0
        %344 = vmatprep.subr.bf16.mxu0 0
        %345 = vmatpush1.bf16.msra.mxu0 0
        %346 = vmatprep.subr.bf16.mxu0 0
        %347 = vmatpush1.bf16.msra.mxu0 0
        %348 = vmatprep.subr.bf16.mxu0 0
        %349 = vmatpush1.bf16.msra.mxu0 0
        %350 = vmatprep.subr.bf16.mxu0 0
        %351 = vmatpush1.bf16.msra.mxu0 0
        %352 = vmatprep.subr.bf16.mxu0 0
        %353 = vmatpush1.bf16.msra.mxu0 0
        %354 = vmatprep.subr.bf16.mxu0 0
        %355 = vmatpush1.bf16.msra.mxu0 0
        %356 = vmatprep.subr.bf16.mxu0 0
        %357 = vmatpush1.bf16.msra.mxu0 0
        %358 = vmatprep.mubr.bf16.mxu0 0
        %359 = vmatmul.mubr.bf16.gmra.mrb[0].mxu0 %v305
        %v360 = vpop.f32.mrb[0].mxu0
        %v361 = vadd.f32 %v240, %v360
        %v362 = vpop.f32.mrb[0].mxu0
        %v363 = vadd.f32 %v240, %v362
        %v364 = vpop.f32.mrb[0].mxu0
        %v365 = vadd.f32 %v245, %v364
        %v366 = vpop.f32.mrb[0].mxu0
        %v367 = vadd.f32 %v245, %v366
        %368 = vmatprep.mubr.bf16.mxu0 0
        %369 = vmatmul.mubr.bf16.gmra.mrb[0].mxu0 %v308
        %v370 = vpop.f32.mrb[0].mxu0
        %v371 = vadd.f32 %v250, %v370
        %v372 = vpop.f32.mrb[0].mxu0
        %v373 = vadd.f32 %v250, %v372
        %v374 = vpop.f32.mrb[0].mxu0
        %v375 = vadd.f32 %v255, %v374
        %v376 = vpop.f32.mrb[0].mxu0
        %v377 = vadd.f32 %v255, %v376
        %378 = vdwg.mxu0
        %379 = vmatprep.subr.bf16.mxu0 %v324
        %380 = vmatpush1.bf16.msra.mxu0 %v321
        %381 = vmatprep.subr.bf16.mxu0 0
        %382 = vmatpush1.bf16.msra.mxu0 0
        %383 = vmatprep.subr.bf16.mxu0 0
        %384 = vmatpush1.bf16.msra.mxu0 0
        %385 = vmatprep.subr.bf16.mxu0 0
        %386 = vmatpush1.bf16.msra.mxu0 0
        %387 = vmatprep.subr.bf16.mxu0 0
        %388 = vmatpush1.bf16.msra.mxu0 0
        %389 = vmatprep.subr.bf16.mxu0 0
        %390 = vmatpush1.bf16.msra.mxu0 0
        %391 = vmatprep.subr.bf16.mxu0 0
        %392 = vmatpush1.bf16.msra.mxu0 0
        %393 = vmatprep.subr.bf16.mxu0 0
        %394 = vmatpush1.bf16.msra.mxu0 0
        %395 = vmatprep.subr.bf16.mxu0 0
        %396 = vmatpush1.bf16.msra.mxu0 0
        %397 = vmatprep.subr.bf16.mxu0 0
        %398 = vmatpush1.bf16.msra.mxu0 0
        %399 = vmatprep.subr.bf16.mxu0 0
        %400 = vmatpush1.bf16.msra.mxu0 0
        %401 = vmatprep.subr.bf16.mxu0 0
        %402 = vmatpush1.bf16.msra.mxu0 0
        %403 = vmatprep.subr.bf16.mxu0 0
        %404 = vmatpush1.bf16.msra.mxu0 0
        %405 = vmatprep.subr.bf16.mxu0 0
        %406 = vmatpush1.bf16.msra.mxu0 0
        %407 = vmatprep.subr.bf16.mxu0 0
        %408 = vmatpush1.bf16.msra.mxu0 0
        %409 = vmatprep.subr.bf16.mxu0 0
        %410 = vmatpush1.bf16.msra.mxu0 0
        %411 = vmatprep.mubr.bf16.mxu0 0
        %412 = vmatmul.mubr.bf16.gmra.mrb[0].mxu0 %v305
        %v413 = vpop.f32.mrb[0].mxu0
        %v414 = vadd.f32 %v240, %v413
        %v415 = vpop.f32.mrb[0].mxu0
        %v416 = vadd.f32 %v240, %v415
        %v417 = vpop.f32.mrb[0].mxu0
        %v418 = vadd.f32 %v245, %v417
        %v419 = vpop.f32.mrb[0].mxu0
        %v420 = vadd.f32 %v245, %v419
        %421 = vmatprep.mubr.bf16.mxu0 0
        %422 = vmatmul.mubr.bf16.gmra.mrb[0].mxu0 %v308
        %v423 = vpop.f32.mrb[0].mxu0
        %v424 = vadd.f32 %v250, %v423
        %v425 = vpop.f32.mrb[0].mxu0
        %v426 = vadd.f32 %v250, %v425
        %v427 = vpop.f32.mrb[0].mxu0
        %v428 = vadd.f32 %v255, %v427
        %v429 = vpop.f32.mrb[0].mxu0
        %v430 = vadd.f32 %v255, %v429
        %431 = vdwg.mxu0
        %v432 = vmax.f32 %v361, 0.0
        %v433 = vmax.f32 %v363, 0.0
        %v434 = vmax.f32 %v414, 0.0
        %v435 = vmax.f32 %v416, 0.0
        %v436 = vmax.f32 %v365, 0.0
        %v437 = vmax.f32 %v367, 0.0
        %v438 = vmax.f32 %v418, 0.0
        %v439 = vmax.f32 %v420, 0.0
        %v440 = vmax.f32 %v371, 0.0
        %v441 = vmax.f32 %v373, 0.0
        %v442 = vmax.f32 %v424, 0.0
        %v443 = vmax.f32 %v426, 0.0
        %v444 = vmax.f32 %v375, 0.0
        %v445 = vmax.f32 %v377, 0.0
        %v446 = vmax.f32 %v428, 0.0
        %v447 = vmax.f32 %v430, 0.0
        %v448 = vmul.f32 %v432, %v264
        %v449 = vmul.f32 %v433, %v264
        %v450 = vmul.f32 %v434, %v264
        %v451 = vmul.f32 %v435, %v264
        %v452 = vmul.f32 %v436, %v269
        %v453 = vmul.f32 %v437, %v269
        %v454 = vmul.f32 %v438, %v269
        %v455 = vmul.f32 %v439, %v269
        %v456 = vmul.f32 %v440, %v274
        %v457 = vmul.f32 %v441, %v274
        %v458 = vmul.f32 %v442, %v274
        %v459 = vmul.f32 %v443, %v274
        %v460 = vmul.f32 %v444, %v279
        %v461 = vmul.f32 %v445, %v279
        %v462 = vmul.f32 %v446, %v279
        %v463 = vmul.f32 %v447, %v279
        %v464 = vadd.f32 %v448, %v452
        %v465 = vadd.f32 %v464, %v456
        %v466 = vadd.f32 %v465, %v460
        %v467 = vrot.slane %v466, 4
        %v468 = vadd.f32 %v466, %v467
        %v469 = vrot.slane %v468, 2
        %v470 = vadd.f32 %v468, %v469
        %v471 = vrot.slane %v470, 1
        %v472 = vadd.f32 %v470, %v471
        %v473 = vadd.f32 %v449, %v453
        %v474 = vadd.f32 %v473, %v457
        %v475 = vadd.f32 %v474, %v461
        %v476 = vrot.slane %v475, 4
        %v477 = vadd.f32 %v475, %v476
        %v478 = vrot.slane %v477, 2
        %v479 = vadd.f32 %v477, %v478
        %v480 = vrot.slane %v479, 1
        %v481 = vadd.f32 %v479, %v480
        %v482 = vadd.f32 %v450, %v454
        %v483 = vadd.f32 %v482, %v458
        %v484 = vadd.f32 %v483, %v462
        %v485 = vrot.slane %v484, 4
        %v486 = vadd.f32 %v484, %v485
        %v487 = vrot.slane %v486, 2
        %v488 = vadd.f32 %v486, %v487
        %v489 = vrot.slane %v488, 1
        %v490 = vadd.f32 %v488, %v489
        %v491 = vadd.f32 %v451, %v455
        %v492 = vadd.f32 %v491, %v459
        %v493 = vadd.f32 %v492, %v463
        %v494 = vrot.slane %v493, 4
        %v495 = vadd.f32 %v493, %v494
        %v496 = vrot.slane %v495, 2
        %v497 = vadd.f32 %v495, %v496
        %v498 = vrot.slane %v497, 1
        %v499 = vadd.f32 %v497, %v498
        %v500 = vstv %s232
        %v501 = vadd.f32 %v472, %v500
        %v502 = vadd.f32 %v481, %v500
        %v503 = vadd.f32 %v490, %v500
        %v504 = vadd.f32 %v499, %v500
        %v509 = vcombine.low %v501, %v502
        %v510 = vcombine.low %v503, %v504
        %v512 = vunpack.c.l.s4 1966171168
        %v513 = vunpack.c.0.s8 %v512
        %v514 = vlaneseq
        %v515 = vshrl.u32 %v514, 7
        %v516 = vsub.s32 %v513, %v515
        %v517 = vrot.slane %v509, %v516
        %v519 = vunpack.c.l.s4 1966171168
        %v520 = vunpack.c.0.s8 %v519
        %v521 = vlaneseq
        %v522 = vshrl.u32 %v521, 7
        %v523 = vsub.s32 %v520, %v522
        %v524 = vrot.slane %v510, %v523
        %v525 = vcombine.low %v517, %v524
        %v527 = vunpack.c.l.s4 1966171168
        %v528 = vunpack.c.0.s8 %v527
        %v529 = vlaneseq
        %v530 = vshrl.u32 %v529, 7
        %v531 = vsub.s32 %v528, %v530
        %v532 = vrot.slane %v525, %v531
        %v534 = vlaneseq
        %vm535 = vcmp.ge.s32.totalorder %v534, 0
        %vm536 = vcmp.lt.s32.totalorder %v534, 512
        %vm537 = vmand %vm535, %vm536
        %538 = vst.msk [vmem:[%s219] sm:$0xf] %vm537, %v532
        %s539 = scalar_lea.vmem %s224, 16
        %v540 = vld [vmem:[%s539] sm:$0x77]
        %v541 = vld [vmem:[%s539 + $0x8] sm:$0x77]
        %v544 = vunpack.c.l.b16 %v540
        %v545 = vunpack.c.h.b16 %v540
        %v546 = vunpack.c.l.b16 %v541
        %v547 = vunpack.c.h.b16 %v541
        %v548 = vpack.c.b16 %v544, %v544
        %v549 = vpack.c.b16 %v545, %v545
        %v550 = vpack.c.b16 %v546, %v546
        %v551 = vpack.c.b16 %v547, %v547
        %v553 = vand.u32 %v548, %v313
        %v556 = vand.u32 %v549, %v313
        %v559 = vand.u32 %v550, %v313
        %v562 = vand.u32 %v551, %v313
        %564 = vmatprep.subr.bf16.mxu0 %v556
        %565 = vmatpush1.bf16.msra.mxu0 %v553
        %566 = vmatprep.subr.bf16.mxu0 0
        %567 = vmatpush1.bf16.msra.mxu0 0
        %568 = vmatprep.subr.bf16.mxu0 0
        %569 = vmatpush1.bf16.msra.mxu0 0
        %570 = vmatprep.subr.bf16.mxu0 0
        %571 = vmatpush1.bf16.msra.mxu0 0
        %572 = vmatprep.subr.bf16.mxu0 0
        %573 = vmatpush1.bf16.msra.mxu0 0
        %574 = vmatprep.subr.bf16.mxu0 0
        %575 = vmatpush1.bf16.msra.mxu0 0
        %576 = vmatprep.subr.bf16.mxu0 0
        %577 = vmatpush1.bf16.msra.mxu0 0
        %578 = vmatprep.subr.bf16.mxu0 0
        %579 = vmatpush1.bf16.msra.mxu0 0
        %580 = vmatprep.subr.bf16.mxu0 0
        %581 = vmatpush1.bf16.msra.mxu0 0
        %582 = vmatprep.subr.bf16.mxu0 0
        %583 = vmatpush1.bf16.msra.mxu0 0
        %584 = vmatprep.subr.bf16.mxu0 0
        %585 = vmatpush1.bf16.msra.mxu0 0
        %586 = vmatprep.subr.bf16.mxu0 0
        %587 = vmatpush1.bf16.msra.mxu0 0
        %588 = vmatprep.subr.bf16.mxu0 0
        %589 = vmatpush1.bf16.msra.mxu0 0
        %590 = vmatprep.subr.bf16.mxu0 0
        %591 = vmatpush1.bf16.msra.mxu0 0
        %592 = vmatprep.subr.bf16.mxu0 0
        %593 = vmatpush1.bf16.msra.mxu0 0
        %594 = vmatprep.subr.bf16.mxu0 0
        %595 = vmatpush1.bf16.msra.mxu0 0
        %596 = vmatprep.mubr.bf16.mxu0 0
        %597 = vmatmul.mubr.bf16.gmra.mrb[0].mxu0 %v305
        %v598 = vpop.f32.mrb[0].mxu0
        %v599 = vadd.f32 %v240, %v598
        %v600 = vpop.f32.mrb[0].mxu0
        %v601 = vadd.f32 %v240, %v600
        %v602 = vpop.f32.mrb[0].mxu0
        %v603 = vadd.f32 %v245, %v602
        %v604 = vpop.f32.mrb[0].mxu0
        %v605 = vadd.f32 %v245, %v604
        %606 = vmatprep.mubr.bf16.mxu0 0
        %607 = vmatmul.mubr.bf16.gmra.mrb[0].mxu0 %v308
        %v608 = vpop.f32.mrb[0].mxu0
        %v609 = vadd.f32 %v250, %v608
        %v610 = vpop.f32.mrb[0].mxu0
        %v611 = vadd.f32 %v250, %v610
        %v612 = vpop.f32.mrb[0].mxu0
        %v613 = vadd.f32 %v255, %v612
        %v614 = vpop.f32.mrb[0].mxu0
        %v615 = vadd.f32 %v255, %v614
        %616 = vdwg.mxu0
        %617 = vmatprep.subr.bf16.mxu0 %v562
        %618 = vmatpush1.bf16.msra.mxu0 %v559
        %619 = vmatprep.subr.bf16.mxu0 0
        %620 = vmatpush1.bf16.msra.mxu0 0
        %621 = vmatprep.subr.bf16.mxu0 0
        %622 = vmatpush1.bf16.msra.mxu0 0
        %623 = vmatprep.subr.bf16.mxu0 0
        %624 = vmatpush1.bf16.msra.mxu0 0
        %625 = vmatprep.subr.bf16.mxu0 0
        %626 = vmatpush1.bf16.msra.mxu0 0
        %627 = vmatprep.subr.bf16.mxu0 0
        %628 = vmatpush1.bf16.msra.mxu0 0
        %629 = vmatprep.subr.bf16.mxu0 0
        %630 = vmatpush1.bf16.msra.mxu0 0
        %631 = vmatprep.subr.bf16.mxu0 0
        %632 = vmatpush1.bf16.msra.mxu0 0
        %633 = vmatprep.subr.bf16.mxu0 0
        %634 = vmatpush1.bf16.msra.mxu0 0
        %635 = vmatprep.subr.bf16.mxu0 0
        %636 = vmatpush1.bf16.msra.mxu0 0
        %637 = vmatprep.subr.bf16.mxu0 0
        %638 = vmatpush1.bf16.msra.mxu0 0
        %639 = vmatprep.subr.bf16.mxu0 0
        %640 = vmatpush1.bf16.msra.mxu0 0
        %641 = vmatprep.subr.bf16.mxu0 0
        %642 = vmatpush1.bf16.msra.mxu0 0
        %643 = vmatprep.subr.bf16.mxu0 0
        %644 = vmatpush1.bf16.msra.mxu0 0
        %645 = vmatprep.subr.bf16.mxu0 0
        %646 = vmatpush1.bf16.msra.mxu0 0
        %647 = vmatprep.subr.bf16.mxu0 0
        %648 = vmatpush1.bf16.msra.mxu0 0
        %649 = vmatprep.mubr.bf16.mxu0 0
        %650 = vmatmul.mubr.bf16.gmra.mrb[0].mxu0 %v305
        %v651 = vpop.f32.mrb[0].mxu0
        %v652 = vadd.f32 %v240, %v651
        %v653 = vpop.f32.mrb[0].mxu0
        %v654 = vadd.f32 %v240, %v653
        %v655 = vpop.f32.mrb[0].mxu0
        %v656 = vadd.f32 %v245, %v655
        %v657 = vpop.f32.mrb[0].mxu0
        %v658 = vadd.f32 %v245, %v657
        %659 = vmatprep.mubr.bf16.mxu0 0
        %660 = vmatmul.mubr.bf16.gmra.mrb[0].mxu0 %v308
        %v661 = vpop.f32.mrb[0].mxu0
        %v662 = vadd.f32 %v250, %v661
        %v663 = vpop.f32.mrb[0].mxu0
        %v664 = vadd.f32 %v250, %v663
        %v665 = vpop.f32.mrb[0].mxu0
        %v666 = vadd.f32 %v255, %v665
        %v667 = vpop.f32.mrb[0].mxu0
        %v668 = vadd.f32 %v255, %v667
        %669 = vdwg.mxu0
        %v670 = vmax.f32 %v599, 0.0
        %v671 = vmax.f32 %v601, 0.0
        %v672 = vmax.f32 %v652, 0.0
        %v673 = vmax.f32 %v654, 0.0
        %v674 = vmax.f32 %v603, 0.0
        %v675 = vmax.f32 %v605, 0.0
        %v676 = vmax.f32 %v656, 0.0
        %v677 = vmax.f32 %v658, 0.0
        %v678 = vmax.f32 %v609, 0.0
        %v679 = vmax.f32 %v611, 0.0
        %v680 = vmax.f32 %v662, 0.0
        %v681 = vmax.f32 %v664, 0.0
        %v682 = vmax.f32 %v613, 0.0
        %v683 = vmax.f32 %v615, 0.0
        %v684 = vmax.f32 %v666, 0.0
        %v685 = vmax.f32 %v668, 0.0
        %v686 = vmul.f32 %v670, %v264
        %v687 = vmul.f32 %v671, %v264
        %v688 = vmul.f32 %v672, %v264
        %v689 = vmul.f32 %v673, %v264
        %v690 = vmul.f32 %v674, %v269
        %v691 = vmul.f32 %v675, %v269
        %v692 = vmul.f32 %v676, %v269
        %v693 = vmul.f32 %v677, %v269
        %v694 = vmul.f32 %v678, %v274
        %v695 = vmul.f32 %v679, %v274
        %v696 = vmul.f32 %v680, %v274
        %v697 = vmul.f32 %v681, %v274
        %v698 = vmul.f32 %v682, %v279
        %v699 = vmul.f32 %v683, %v279
        %v700 = vmul.f32 %v684, %v279
        %v701 = vmul.f32 %v685, %v279
        %v702 = vadd.f32 %v686, %v690
        %v703 = vadd.f32 %v702, %v694
        %v704 = vadd.f32 %v703, %v698
        %v705 = vrot.slane %v704, 4
        %v706 = vadd.f32 %v704, %v705
        %v707 = vrot.slane %v706, 2
        %v708 = vadd.f32 %v706, %v707
        %v709 = vrot.slane %v708, 1
        %v710 = vadd.f32 %v708, %v709
        %v711 = vadd.f32 %v687, %v691
        %v712 = vadd.f32 %v711, %v695
        %v713 = vadd.f32 %v712, %v699
        %v714 = vrot.slane %v713, 4
        %v715 = vadd.f32 %v713, %v714
        %v716 = vrot.slane %v715, 2
        %v717 = vadd.f32 %v715, %v716
        %v718 = vrot.slane %v717, 1
        %v719 = vadd.f32 %v717, %v718
        %v720 = vadd.f32 %v688, %v692
        %v721 = vadd.f32 %v720, %v696
        %v722 = vadd.f32 %v721, %v700
        %v723 = vrot.slane %v722, 4
        %v724 = vadd.f32 %v722, %v723
        %v725 = vrot.slane %v724, 2
        %v726 = vadd.f32 %v724, %v725
        %v727 = vrot.slane %v726, 1
        %v728 = vadd.f32 %v726, %v727
        %v729 = vadd.f32 %v689, %v693
        %v730 = vadd.f32 %v729, %v697
        %v731 = vadd.f32 %v730, %v701
        %v732 = vrot.slane %v731, 4
        %v733 = vadd.f32 %v731, %v732
        %v734 = vrot.slane %v733, 2
        %v735 = vadd.f32 %v733, %v734
        %v736 = vrot.slane %v735, 1
        %v737 = vadd.f32 %v735, %v736
        %v738 = vadd.f32 %v710, %v500
        %v739 = vadd.f32 %v719, %v500
        %v740 = vadd.f32 %v728, %v500
        %v741 = vadd.f32 %v737, %v500
        %v746 = vcombine.low %v738, %v739
        %v747 = vcombine.low %v740, %v741
        %v749 = vunpack.c.l.s4 1966171168
        %v750 = vunpack.c.0.s8 %v749
        %v751 = vlaneseq
        %v752 = vshrl.u32 %v751, 7
        %v753 = vsub.s32 %v750, %v752
        %v754 = vrot.slane %v746, %v753
        %v756 = vunpack.c.l.s4 1966171168
        %v757 = vunpack.c.0.s8 %v756
        %v758 = vlaneseq
        %v759 = vshrl.u32 %v758, 7
        %v760 = vsub.s32 %v757, %v759
        %v761 = vrot.slane %v747, %v760
        %v762 = vcombine.low %v754, %v761
        %v764 = vunpack.c.l.s4 1966171168
        %v765 = vunpack.c.0.s8 %v764
        %v766 = vlaneseq
        %v767 = vshrl.u32 %v766, 7
        %v768 = vsub.s32 %v765, %v767
        %v769 = vrot.slane %v762, %v768
        %s771 = scalar_lea.vmem %s219, 4 [#allocation3]
        %772 = vst.msk [vmem:[%s771] sm:$0xf] %vm537, %v769
        %s773 = sand.u32 %s138, 1
        %s774 = scalar_lea.sflag [#allocation4], %s773
        %s775 = sand.u32 %s138, 1
        %s776 = smul.addr %s775, 8
        %s777 = scalar_lea.vmem [#allocation3], %s776
        // Predicated region
        $region41: #{tpu_custom_call.1} parent=39 // pred_check
          %p778 = pneg %p148
        $region42: #{tpu_custom_call.1} parent=39 // pred_check_branch
          %780 = sbr.rel (%p778) target = $region44
        $region43: #{tpu_custom_call.1} parent=39 // pred_region
          %s781 = smul.u32 8, %s20
          %s783 = ssub.s32 128, 128
          %784 = vsyncadd %s774, %s783
          %s785 = smul.addr %s781, 16
          %s786 = scalar_lea.hbm %s5, %s785
          %s788 = sshll.u32 %s777, 4
          %s789 = int_to_ptr.vmem [resolvable:$true] %s788
          %791 = dma.vmem_to_hbm [thread:$0]  %s789, 128, %s786, %s774
        $region44: #{tpu_custom_call.1} parent=39 // pred_fallthru
          _
      $region40: #{tpu_custom_call.1} parent=5 // pred_fallthru
        _
      %p792 = scmp.le.s32.totalorder 2, %s15
      // Predicated region
      $region45: #{tpu_custom_call.1} parent=5 // pred_check
        %p793 = pneg %p792
      $region46: #{tpu_custom_call.1} parent=5 // pred_check_branch
        %795 = sbr.rel (%p793) target = $region48
      $region47: #{tpu_custom_call.1} parent=5 // pred_region
        %s796 = ssub.s32 %s15, 2
        // Predicated region
        $region49: #{tpu_custom_call.1} parent=47 // pred_check
          %p797 = pneg %p154
        $region50: #{tpu_custom_call.1} parent=47 // pred_check_branch
          %799 = sbr.rel (%p797) target = $region52
        $region51: #{tpu_custom_call.1} parent=47 // pred_region
          %s800 = sand.u32 %s139, 1
          %s801 = scalar_lea.sflag [#allocation4], %s800
          %s802 = sand.u32 %s139, 1
          %s803 = smul.addr %s802, 8
          %s804 = scalar_lea.vmem [#allocation3], %s803
          %805 = dma.done %s801, 128
        $region52: #{tpu_custom_call.1} parent=47 // pred_fallthru
          _
      $region48: #{tpu_custom_call.1} parent=5 // pred_fallthru
        _
    $region6: #{tpu_custom_call.1} parent=1 // loop_footer
      %s19 = sadd.s32 1, %s15
    $region7: #{tpu_custom_call.1} parent=1 // loop_footer_branch
      %14 = sbr.rel target = $region3
    $region8: #{tpu_custom_call.1} parent=1 // loop_exit
      _
    %806 = vsyncpa [#allocation4], 1
    %s807 = scalar_lea.sflag [#allocation4], 1
    %808 = vsyncpa %s807, 1

</llo_original>
